<compile_context>
chip_gen: v6e
topology: v6e:2x2x1
jax: 0.10.0
libtpu: 0.0.40
codegen_flags: <defaults>
</compile_context>

<pallas_src>
import functools

import jax
import jax.numpy as jnp
from jax.experimental import pallas as pl
from jax.experimental.pallas import tpu as pltpu

_LANE = 128
_VMEM = pl.BlockSpec(memory_space=pltpu.MemorySpace.VMEM)


def _round_up(x, m):
    return (x + m - 1) // m * m


# --------------------------- MLM head: tiled matmul ---------------------------

def _mlm_kernel(t_ref, w_ref, b_ref, o_ref):
    """One (TILE_M, TILE_N) output tile: bf16 inputs, f32 accumulation, bf16 store."""
    acc = jnp.dot(t_ref[...], w_ref[...], preferred_element_type=jnp.float32)
    o_ref[...] = (acc + b_ref[...]).astype(o_ref.dtype)


def _mlm_head(title_flat, w_mlm, b_mlm, tile_m, tile_n):
    """pred_mlm = title_flat @ w_mlm + b_mlm over a (rows, vocab) grid, bf16 out."""
    m_pad, title_size = title_flat.shape
    _, vocab_pad = w_mlm.shape
    grid = (m_pad // tile_m, vocab_pad // tile_n)

    # Double-buffered tiles (bf16 in / bf16 out) + f32 accumulator headroom.
    work = 2 * (tile_m * title_size * 2 + title_size * tile_n * 2
                + tile_n * 4 + tile_m * tile_n * 2) + tile_m * tile_n * 4
    vmem_limit = int(min(64 * 1024 * 1024, max(16 * 1024 * 1024, 2 * work)))

    flops = 2 * m_pad * title_size * vocab_pad
    bytes_accessed = (m_pad * title_size * 2 + title_size * vocab_pad * 2
                      + vocab_pad * 4 + m_pad * vocab_pad * 2)

    return pl.pallas_call(
        _mlm_kernel,
        out_shape=jax.ShapeDtypeStruct((m_pad, vocab_pad), jnp.bfloat16),
        grid_spec=pltpu.PrefetchScalarGridSpec(
            num_scalar_prefetch=0,
            grid=grid,
            in_specs=[
                pl.BlockSpec((tile_m, title_size), lambda i, j: (i, 0)),
                pl.BlockSpec((title_size, tile_n), lambda i, j: (0, j)),
                pl.BlockSpec((1, tile_n), lambda i, j: (0, j)),
            ],
            out_specs=pl.BlockSpec((tile_m, tile_n), lambda i, j: (i, j)),
        ),
        compiler_params=pltpu.CompilerParams(
            dimension_semantics=("parallel", "parallel"),
            vmem_limit_bytes=vmem_limit,
        ),
        cost_estimate=pl.CostEstimate(flops=flops, transcendentals=0,
                                      bytes_accessed=bytes_accessed),
    )(title_flat, w_mlm, b_mlm)


# -------------------- tag + fc heads + L2-normalize (tiny) --------------------

def _heads_kernel(video_ref, cls_ref, w_hv_ref, w_ht_ref, b_h_ref,
                  tag_ref, emb_ref, *, head_pad):
    """video @ [Wtag | Wfc_v] (packed, one MXU pass) + title_cls @ Wfc_t into the fc half.

    video_ref : [B, VIDEO]            bf16
    cls_ref   : [B, TITLE]            bf16  (title[:, 0], sliced in the wrapper)
    w_hv_ref  : [VIDEO, 2*head_pad]   bf16  packed [Wtag_pad | Wfc_video_pad]
    w_ht_ref  : [TITLE, head_pad]     bf16  Wfc_title_pad only (no zero half)
    b_h_ref   : [1, 2*head_pad]       f32   packed [btag_pad | bfc_pad]
    outputs   : tag [B, head_pad] f32, emb [B, head_pad] f32 (lane-dense, sliced in wrapper)
    """
    heads = jnp.dot(video_ref[...], w_hv_ref[...], preferred_element_type=jnp.float32)
    heads = heads + b_h_ref[...]                                        # [B, 2*head_pad]
    fc_t = jnp.dot(cls_ref[...], w_ht_ref[...], preferred_element_type=jnp.float32)

    # tag half: sigmoid (padded lanes -> 0.5, sliced off in the wrapper)
    tag_ref[...] = jax.nn.sigmoid(heads[:, :head_pad])

    # fc half: add the title-CLS contribution, then L2-normalize rows. Padded lanes are
    # exactly 0 (zero-padded W/b), so the sum of squares covers only real HIDDEN_SIZE cols.
    emb = heads[:, head_pad:] + fc_t
    sq = jnp.sum(emb * emb, axis=1, keepdims=True)
    inv = jax.lax.rsqrt(jnp.maximum(sq, 1e-24))   # eps^2 preserves max(||x||, 1e-12) semantics
    emb_ref[...] = emb * inv


# ------------------------------ thin wrapper ----------------------------------

def mlm_cls_forward(prepped, cfg, video_feature, title_feature):
    """Pallas implementation of MlmCls.forward with label=None."""
    B, seq, title_size = title_feature.shape
    head_pad = prepped["head_pad"]
    vocab_pad = prepped["vocab_pad"]
    tile_n = prepped["tile_n"]
    n_tag = cfg["NUM_CLASSES_TAG"]
    hidden = cfg["HIDDEN_SIZE"]
    n_vocab = cfg["NUM_CLASSES_VOCAB"]

    # ---- MLM head: flatten rows in the wrapper, bf16 activations, (rows, vocab) grid ----
    m_rows = B * seq
    tile_m = min(_round_up(m_rows, 16), 256)       # 256 fills the v6e/v7x MXU; fine on v5e too
    m_pad = _round_up(m_rows, tile_m)
    title_flat = title_feature.reshape(m_rows, title_size).astype(jnp.bfloat16)
    if m_pad != m_rows:
        title_flat = jnp.pad(title_flat, ((0, m_pad - m_rows), (0, 0)))

    mlm_pad = _mlm_head(title_flat, prepped["w_mlm"], prepped["b_mlm"], tile_m, tile_n)

    pred_mlm = mlm_pad[:m_rows] if m_pad != m_rows else mlm_pad
    pred_mlm = pred_mlm.reshape(B, seq, vocab_pad)
    if vocab_pad != n_vocab:
        # Only slice when the vocab is not 128-aligned (avoids copying the largest tensor
        # at production sizes where the vocab should be kept 128-aligned).
        pred_mlm = pred_mlm[..., :n_vocab]

    # ---- tag + fc heads: tiny single-shot kernel ----
    video_bf = video_feature.astype(jnp.bfloat16)
    title_cls = title_feature[:, 0].astype(jnp.bfloat16)

    tag_pad, emb_pad = pl.pallas_call(
        functools.partial(_heads_kernel, head_pad=head_pad),
        out_shape=(jax.ShapeDtypeStruct((B, head_pad), jnp.float32),
                   jax.ShapeDtypeStruct((B, head_pad), jnp.float32)),
        in_specs=[_VMEM] * 5,
        out_specs=(_VMEM, _VMEM),
    )(video_bf, title_cls, prepped["w_hv"], prepped["w_ht"], prepped["b_h"])

    pred_tag = tag_pad[:, :n_tag]
    normed_embedding = emb_pad[:, :hidden]

    loss_tag = None                       # label is None
    loss_mlm = jnp.float32(0.0)           # torch.tensor(0).float()
    return (pred_tag, normed_embedding), loss_tag, loss_mlm, pred_mlm


# --------------------- param init & one-time preprocessing --------------------

def init_params(key, cfg):
    """Deterministic init mirroring torch.nn.Linear shapes (weights stored as [in, out])."""
    ks = jax.random.split(key, 6)

    def linear(kw, kb, fan_in, fan_out):
        bound = 1.0 / jnp.sqrt(fan_in)
        w = jax.random.uniform(kw, (fan_in, fan_out), jnp.float32, -bound, bound)
        b = jax.random.uniform(kb, (1, fan_out), jnp.float32, -bound, bound)
        return w, b

    w_tag, b_tag = linear(ks[0], ks[1], cfg["VIDEO_SIZE"], cfg["NUM_CLASSES_TAG"])
    w_mlm, b_mlm = linear(ks[2], ks[3], cfg["TITLE_SIZE"], cfg["NUM_CLASSES_VOCAB"])
    w_fc, b_fc = linear(ks[4], ks[5], cfg["INPUT_SIZE"], cfg["HIDDEN_SIZE"])
    return dict(w_tag=w_tag, b_tag=b_tag,
                w_mlm=w_mlm, b_mlm=b_mlm,
                w_fc=w_fc, b_fc=b_fc)


def prepare_params(params, cfg):
    """One-time repacking: pad output dims to 128 lanes (and the vocab to a tile_n multiple),
    cast weights to bf16, and pack the tag+fc video-side heads into one [V, 2*head_pad] weight
    so both tiny heads ride a single MXU pass. Biases stay f32 (added to the f32 accumulator)."""
    V = cfg["VIDEO_SIZE"]
    T = cfg["TITLE_SIZE"]
    H = cfg["HIDDEN_SIZE"]
    n_tag = cfg["NUM_CLASSES_TAG"]
    n_vocab = cfg["NUM_CLASSES_VOCAB"]

    head_pad = _round_up(max(n_tag, H), _LANE)
    tile_n = min(_round_up(n_vocab, _LANE), 2048)      # v7x-safe vocab tile (bf16 weights)
    vocab_pad = _round_up(n_vocab, tile_n)

    def pad_cols(x, n):
        return jnp.pad(x, ((0, 0), (0, n - x.shape[1])))

    w_tag_p = pad_cols(params["w_tag"], head_pad)              # [V, head_pad]
    w_fc_v = pad_cols(params["w_fc"][:V], head_pad)            # [V, head_pad]
    w_fc_t = pad_cols(params["w_fc"][V:], head_pad)            # [T, head_pad]

    w_hv = jnp.concatenate([w_tag_p, w_fc_v], axis=1).astype(jnp.bfloat16)   # [V, 2*head_pad]
    w_ht = w_fc_t.astype(jnp.bfloat16)                                       # [T, head_pad]
    b_h = jnp.concatenate([pad_cols(params["b_tag"], head_pad),
                           pad_cols(params["b_fc"], head_pad)], axis=1)      # [1, 2*head_pad] f32

    w_mlm_p = pad_cols(params["w_mlm"], vocab_pad).astype(jnp.bfloat16)      # [T, vocab_pad]
    b_mlm_p = pad_cols(params["b_mlm"], vocab_pad)                           # [1, vocab_pad] f32

    return dict(w_hv=w_hv, w_ht=w_ht, b_h=b_h,
                w_mlm=w_mlm_p, b_mlm=b_mlm_p,
                head_pad=head_pad, vocab_pad=vocab_pad, tile_n=tile_n)


# ---------------------------------- main ---------------------------------------

if __name__ == "__main__":
    cfg = dict(
        VIDEO_SIZE=32,
        TITLE_SIZE=32,
        INPUT_SIZE=64,          # VIDEO_SIZE + TITLE_SIZE (concat)
        HIDDEN_SIZE=32,
        NUM_CLASSES_TAG=16,
        NUM_CLASSES_VOCAB=64,
    )
    B, SEQ = 2, 8

    key = jax.random.PRNGKey(0)
    kp, kv, kt = jax.random.split(key, 3)
    params = init_params(kp, cfg)
    prepped = prepare_params(params, cfg)

    video_feature = jax.random.normal(kv, (B, cfg["VIDEO_SIZE"]), jnp.float32)
    title_feature = jax.random.normal(kt, (B, SEQ, cfg["TITLE_SIZE"]), jnp.float32)

    fwd = jax.jit(functools.partial(mlm_cls_forward, prepped, cfg))
    (pred_tag, normed_emb), loss_tag, loss_mlm, pred_mlm = fwd(video_feature, title_feature)
    jax.block_until_ready((pred_tag, normed_emb, loss_mlm, pred_mlm))

    # lightweight sanity checks against a pure-JAX reference (same bf16-cast weights/inputs)
    def _bf(x):
        return x.astype(jnp.bfloat16).astype(jnp.float32)

    video_r = _bf(video_feature)
    title_r = _bf(title_feature)
    ref_tag = jax.nn.sigmoid(video_r @ _bf(params["w_tag"]) + params["b_tag"])
    ref_mlm = jnp.einsum("bst,tv->bsv", title_r, _bf(params["w_mlm"])) + params["b_mlm"]
    feat = jnp.concatenate([video_r, title_r[:, 0]], axis=1)
    emb = feat @ _bf(params["w_fc"]) + params["b_fc"]
    ref_emb = emb / jnp.maximum(jnp.linalg.norm(emb, axis=1, keepdims=True), 1e-12)

    assert pred_tag.shape == (B, cfg["NUM_CLASSES_TAG"])
    assert normed_emb.shape == (B, cfg["HIDDEN_SIZE"])
    assert pred_mlm.shape == (B, SEQ, cfg["NUM_CLASSES_VOCAB"])
    assert pred_mlm.dtype == jnp.bfloat16
    assert jnp.allclose(pred_tag, ref_tag, atol=2e-3, rtol=2e-3)
    assert jnp.allclose(normed_emb, ref_emb, atol=2e-3, rtol=2e-3)
    assert jnp.allclose(pred_mlm.astype(jnp.float32), ref_mlm, atol=5e-2, rtol=3e-2)
    assert loss_tag is None
    assert float(loss_mlm) == 0.0

    print("KERNEL_OK")
</pallas_src>

<mosaic_0001>
module attributes {stable_mosaic.version = 11 : i64} {
  func.func @_mlm_kernel(%arg0: i32, %arg1: i32, %arg2: memref<16x32xbf16, #tpu.memory_space<vmem>>, %arg3: memref<32x128xbf16, #tpu.memory_space<vmem>>, %arg4: memref<1x128xf32, #tpu.memory_space<vmem>>, %arg5: memref<16x128xbf16, #tpu.memory_space<vmem>>) attributes {dimension_semantics = [#tpu.dimension_semantics<parallel>, #tpu.dimension_semantics<parallel>], iteration_bounds = array<i64: 1, 1>, scalar_prefetch = 0 : i64, scratch_operands = 0 : i64, tpu.core_type = #tpu.core_type<tc>, window_params = [{transform_indices = @transform_0, window_bounds = array<i64: 16, 32>}, {transform_indices = @transform_1, window_bounds = array<i64: 32, 128>}, {transform_indices = @transform_2, window_bounds = array<i64: 1, 128>}, {transform_indices = @transform_3, window_bounds = array<i64: 16, 128>}]} {
    %c0 = arith.constant 0 : index
    %c0_0 = arith.constant 0 : index
    %0 = vector.load %arg2[%c0, %c0_0] : memref<16x32xbf16, #tpu.memory_space<vmem>>, vector<16x32xbf16>
    %c0_1 = arith.constant 0 : index
    %c0_2 = arith.constant 0 : index
    %1 = vector.load %arg3[%c0_1, %c0_2] : memref<32x128xbf16, #tpu.memory_space<vmem>>, vector<32x128xbf16>
    %cst = arith.constant dense<0.000000e+00> : vector<16x128xf32>
    %2 = tpu.matmul %0, %1, %cst {dimension_numbers = #tpu.dot_dimension_numbers<[1], [0], [0], [1], [0, 0, 1, 1], [], []>} : vector<16x32xbf16>, vector<32x128xbf16>, vector<16x128xf32> -> vector<16x128xf32>
    %c0_3 = arith.constant 0 : index
    %c0_4 = arith.constant 0 : index
    %3 = vector.load %arg4[%c0_3, %c0_4] : memref<1x128xf32, #tpu.memory_space<vmem>>, vector<1x128xf32>
    %4 = vector.broadcast %3 : vector<1x128xf32> to vector<16x128xf32>
    %5 = arith.addf %2, %4 : vector<16x128xf32>
    %6 = arith.truncf %5 : vector<16x128xf32> to vector<16x128xbf16>
    %c0_5 = arith.constant 0 : index
    %c0_6 = arith.constant 0 : index
    %7 = vector.load %arg5[%c0_5, %c0_6] : memref<16x128xbf16, #tpu.memory_space<vmem>>, vector<16x128xbf16>
    tpu.vector_store %arg5[%c0_5, %c0_6], %6 {strides = array<i32>} : memref<16x128xbf16, #tpu.memory_space<vmem>>, vector<16x128xbf16>,
    return
  }
  func.func @transform_0(%arg0: i32, %arg1: i32) -> (i32, i32) {
    %c0_i32 = arith.constant 0 : i32
    %c0_i32_0 = arith.constant 0 : i32
    return %arg0, %c0_i32 : i32, i32
  }
  func.func @transform_1(%arg0: i32, %arg1: i32) -> (i32, i32) {
    %c0_i32 = arith.constant 0 : i32
    %c0_i32_0 = arith.constant 0 : i32
    return %c0_i32, %arg1 : i32, i32
  }
  func.func @transform_2(%arg0: i32, %arg1: i32) -> (i32, i32) {
    %c0_i32 = arith.constant 0 : i32
    %c0_i32_0 = arith.constant 0 : i32
    return %c0_i32, %arg1 : i32, i32
  }
  func.func @transform_3(%arg0: i32, %arg1: i32) -> (i32, i32) {
    %c0_i32 = arith.constant 0 : i32
    return %arg0, %arg1 : i32, i32
  }
}

module attributes {stable_mosaic.version = 11 : i64} {
  func.func @_heads_kernel(%arg0: memref<2x32xbf16, #tpu.memory_space<vmem>>, %arg1: memref<2x32xbf16, #tpu.memory_space<vmem>>, %arg2: memref<32x256xbf16, #tpu.memory_space<vmem>>, %arg3: memref<32x128xbf16, #tpu.memory_space<vmem>>, %arg4: memref<1x256xf32, #tpu.memory_space<vmem>>, %arg5: memref<2x128xf32, #tpu.memory_space<vmem>>, %arg6: memref<2x128xf32, #tpu.memory_space<vmem>>) attributes {dimension_semantics = [], scalar_prefetch = 0 : i64, scratch_operands = 0 : i64, tpu.core_type = #tpu.core_type<tc>} {
    %c0 = arith.constant 0 : index
    %c0_0 = arith.constant 0 : index
    %0 = vector.load %arg0[%c0, %c0_0] : memref<2x32xbf16, #tpu.memory_space<vmem>>, vector<2x32xbf16>
    %c0_1 = arith.constant 0 : index
    %c0_2 = arith.constant 0 : index
    %1 = vector.load %arg2[%c0_1, %c0_2] : memref<32x256xbf16, #tpu.memory_space<vmem>>, vector<32x256xbf16>
    %cst = arith.constant dense<0.000000e+00> : vector<2x256xf32>
    %2 = tpu.matmul %0, %1, %cst {dimension_numbers = #tpu.dot_dimension_numbers<[1], [0], [0], [1], [0, 0, 1, 1], [], []>} : vector<2x32xbf16>, vector<32x256xbf16>, vector<2x256xf32> -> vector<2x256xf32>
    %c0_3 = arith.constant 0 : index
    %c0_4 = arith.constant 0 : index
    %3 = vector.load %arg4[%c0_3, %c0_4] : memref<1x256xf32, #tpu.memory_space<vmem>>, vector<1x256xf32>
    %4 = vector.broadcast %3 : vector<1x256xf32> to vector<2x256xf32>
    %5 = arith.addf %2, %4 : vector<2x256xf32>
    %c0_5 = arith.constant 0 : index
    %c0_6 = arith.constant 0 : index
    %6 = vector.load %arg1[%c0_5, %c0_6] : memref<2x32xbf16, #tpu.memory_space<vmem>>, vector<2x32xbf16>
    %c0_7 = arith.constant 0 : index
    %c0_8 = arith.constant 0 : index
    %7 = vector.load %arg3[%c0_7, %c0_8] : memref<32x128xbf16, #tpu.memory_space<vmem>>, vector<32x128xbf16>
    %cst_9 = arith.constant dense<0.000000e+00> : vector<2x128xf32>
    %8 = tpu.matmul %6, %7, %cst_9 {dimension_numbers = #tpu.dot_dimension_numbers<[1], [0], [0], [1], [0, 0, 1, 1], [], []>} : vector<2x32xbf16>, vector<32x128xbf16>, vector<2x128xf32> -> vector<2x128xf32>
    %9 = vector.extract_strided_slice %5 {offsets = [0, 0], sizes = [2, 128], strides = [1, 1]} : vector<2x256xf32> to vector<2x128xf32>
    %10 = arith.negf %9 : vector<2x128xf32>
    %11 = math.exp %10 : vector<2x128xf32>
    %cst_10 = arith.constant 1.000000e+00 : f32
    %12 = vector.broadcast %cst_10 : f32 to vector<2x128xf32>
    %13 = arith.addf %12, %11 : vector<2x128xf32>
    %14 = arith.divf %12, %13 : vector<2x128xf32>
    %c0_11 = arith.constant 0 : index
    %c0_12 = arith.constant 0 : index
    %15 = vector.load %arg5[%c0_11, %c0_12] : memref<2x128xf32, #tpu.memory_space<vmem>>, vector<2x128xf32>
    tpu.vector_store %arg5[%c0_11, %c0_12], %14 {strides = array<i32>} : memref<2x128xf32, #tpu.memory_space<vmem>>, vector<2x128xf32>,
    %16 = vector.extract_strided_slice %5 {offsets = [0, 128], sizes = [2, 128], strides = [1, 1]} : vector<2x256xf32> to vector<2x128xf32>
    %17 = arith.addf %16, %8 : vector<2x128xf32>
    %18 = arith.mulf %17, %17 : vector<2x128xf32>
    %cst_13 = arith.constant dense<0.000000e+00> : vector<2xf32>
    %19 = vector.multi_reduction <add>, %18, %cst_13 [1] : vector<2x128xf32> to vector<2xf32>
    %20 = vector.shape_cast %19 : vector<2xf32> to vector<2x1xf32>
    %cst_14 = arith.constant 1.000000e-24 : f32
    %21 = vector.broadcast %cst_14 : f32 to vector<2x1xf32>
    %22 = arith.maximumf %20, %21 : vector<2x1xf32>
    %23 = math.rsqrt %22 : vector<2x1xf32>
    %24 = vector.broadcast %23 : vector<2x1xf32> to vector<2x128xf32>
    %25 = arith.mulf %17, %24 : vector<2x128xf32>
    %c0_15 = arith.constant 0 : index
    %c0_16 = arith.constant 0 : index
    %26 = vector.load %arg6[%c0_15, %c0_16] : memref<2x128xf32, #tpu.memory_space<vmem>>, vector<2x128xf32>
    tpu.vector_store %arg6[%c0_15, %c0_16], %25 {strides = array<i32>} : memref<2x128xf32, #tpu.memory_space<vmem>>, vector<2x128xf32>,
    return
  }
}

</mosaic_0001>

<llo_original>
// kernel: mlm_cls_forward.2
$region0: #{mlm_cls_forward.2}
  #allocation0 [shape = 'u32[]', space=smem, size = 0x4, offset = 0x4, fixed_abs, tag = 'smem constant byte address 0x4 - core index']
  #allocation1 [shape = 'u32[144,128]{1,0:T(1,128)}', space=vmem, size = 0x12000, scoped, tag = 'internal scratch']
  %s0 = inlined_call_operand.vmem [shape: bf16[16,32], index: 0, kind: input, shape index: {}]
  %s1 = inlined_call_operand.vmem [shape: bf16[32,128], index: 1, kind: input, shape index: {}]
  %s2 = inlined_call_operand.vmem [shape: f32[1,128], index: 2, kind: input, shape index: {}]
  %s3 = inlined_call_operand.hbm [shape: bf16[16,128], index: 3, kind: output, shape index: {}]
  %s4 = sld [smem:[#allocation0]]
  $region22: #{mlm_cls_forward.2} parent=0
    _
  %s6 = ssub.s32 1, %s4
  %s7 = scalar_select 0, %s6, %s4
  $region1: #{mlm_cls_forward.2} parent=0
    #allocation2 [shape = 'u8[4096]{0}', space=vmem, size = 0x1000, scoped, tag = 'output window, operand 0, single buffered']
    #allocation3 [shape = 's32[1]{0}', space=sflag, size = 0x4, scoped, tag = 'scoped memory for mlm_cls_forward.2']
    %8 = vsyncpa [#allocation3], 0
    // Predicated region
    $region2: #{mlm_cls_forward.2} parent=1 // pred_check
      _
    $region3: #{mlm_cls_forward.2} parent=1 // pred_check_branch
      %10 = sbr.rel (0) target = $region5
    $region4: #{mlm_cls_forward.2} parent=1 // pred_region
      _
    $region5: #{mlm_cls_forward.2} parent=1 // pred_fallthru
      _
    // Predicated region
    $region6: #{mlm_cls_forward.2} parent=1 // pred_check
      _
    $region7: #{mlm_cls_forward.2} parent=1 // pred_check_branch
      %12 = sbr.rel (0) target = $region9
    $region8: #{mlm_cls_forward.2} parent=1 // pred_region
      _
    $region9: #{mlm_cls_forward.2} parent=1 // pred_fallthru
      _
    // Predicated region
    $region10: #{mlm_cls_forward.2} parent=1 // pred_check
      _
    $region11: #{mlm_cls_forward.2} parent=1 // pred_check_branch
      %14 = sbr.rel (0) target = $region13
    $region12: #{mlm_cls_forward.2} parent=1 // pred_region
      _
    $region13: #{mlm_cls_forward.2} parent=1 // pred_fallthru
      _
    %v16 = vld [vmem:[%s0] sm:$0xf]
    %v17 = vld [vmem:[%s0 + $0x4] sm:$0xf]
    %v18 = vld [vmem:[%s1] sm:$0xf]
    %v19 = vld [vmem:[%s1 + $0x4] sm:$0xf]
    %v20 = vld [vmem:[%s1 + $0x8] sm:$0xf]
    %v21 = vld [vmem:[%s1 + $0xc] sm:$0xf]
    %v22 = vld [vmem:[%s2] sm:$0x1]
    %v24 = vlaneseq
    %v25 = vshrl.u32 %v24, 7
    %v26 = vsub.s32 0, %v25
    %v27 = vrot.slane %v22, %v26
    %v31 = vunpack.c.l.b16 %v16
    %v32 = vunpack.c.l.b16 %v17
    %v33 = vpack.c.b16 %v32, %v31
    %v38 = vunpack.c.l.b16 %v18
    %v39 = vunpack.c.l.b16 %v19
    %v40 = vunpack.c.l.b16 %v20
    %v41 = vunpack.c.l.b16 %v21
    %v42 = vpack.c.b16 %v39, %v38
    %v43 = vpack.c.b16 %v41, %v40
    %vm46 = vcmask 261120
    %v48 = vsel %vm46, %v33, 0
    %50 = vmatprep.subr.bf16.mxu0 0
    %51 = vmatpush1.bf16.msra.mxu0 0
    %52 = vmatprep.subr.bf16.mxu0 0
    %53 = vmatpush1.bf16.msra.mxu0 0
    %54 = vmatprep.subr.bf16.mxu0 0
    %55 = vmatpush1.bf16.msra.mxu0 0
    %56 = vmatprep.subr.bf16.mxu0 0
    %57 = vmatpush1.bf16.msra.mxu0 0
    %58 = vmatprep.subr.bf16.mxu0 0
    %59 = vmatpush1.bf16.msra.mxu0 0
    %60 = vmatprep.subr.bf16.mxu0 0
    %61 = vmatpush1.bf16.msra.mxu0 0
    %62 = vmatprep.subr.bf16.mxu0 0
    %63 = vmatpush1.bf16.msra.mxu0 %v43
    %64 = vmatprep.subr.bf16.mxu0 0
    %65 = vmatpush1.bf16.msra.mxu0 %v42
    %66 = vmatprep.subr.bf16.mxu0 0
    %67 = vmatpush2.bf16.msra.mxu0 0
    %68 = vmatprep.subr.bf16.mxu0 0
    %69 = vmatpush2.bf16.msra.mxu0 0
    %70 = vmatprep.subr.bf16.mxu0 0
    %71 = vmatpush2.bf16.msra.mxu0 0
    %72 = vmatprep.subr.bf16.mxu0 0
    %73 = vmatpush2.bf16.msra.mxu0 0
    %74 = vmatprep.subr.bf16.mxu0 0
    %75 = vmatpush2.bf16.msra.mxu0 0
    %76 = vmatprep.subr.bf16.mxu0 0
    %77 = vmatpush2.bf16.msra.mxu0 0
    %78 = vmatprep.subr.bf16.mxu0 0
    %79 = vmatpush2.bf16.msra.mxu0 0
    %80 = vmatprep.subr.bf16.mxu0 0
    %81 = vmatpush2.bf16.msra.mxu0 0
    %82 = vmatprep.mubr.bf16.mxu0 0
    %83 = vmatmul.mubr.bf16.gmra.mxu0 %v48
    %v84 = vpop.f32.mrf.mxu0
    %v85 = vadd.f32 %v27, %v84
    %v86 = vpop.f32.mrf.mxu0
    %v87 = vpop.f32.mrf.mxu0
    %v88 = vadd.f32 %v27, %v87
    %v89 = vpop.f32.mrf.mxu0
    %90 = vdwg.mxu0
    %v91 = vpack.c.bf16 %v88, %v85
    %v93 = vunpack.c.l.b16 %v91
    %v94 = vunpack.c.h.b16 %v91
    %v95 = vpack.c.b16 %v93, %v93
    %v96 = vpack.c.b16 %v94, %v94
    %99 = vst [vmem:[#allocation2] sm:$0xf] %v95
    %100 = vst [vmem:[#allocation2 + $0x4] sm:$0xf] %v96
    // Predicated region
    $region14: #{mlm_cls_forward.2} parent=1 // pred_check
      _
    $region15: #{mlm_cls_forward.2} parent=1 // pred_check_branch
      %102 = sbr.rel (0) target = $region17
    $region16: #{mlm_cls_forward.2} parent=1 // pred_region
      %s104 = ssub.s32 128, 128
      %105 = vsyncadd [#allocation3], %s104
      %s106 = sshll.u32 [#allocation2], 4
      %s107 = int_to_ptr.vmem [resolvable:$true] %s106
      %112 = dma.vmem_to_hbm [thread:$0]  %s107, 128, %s3, [#allocation3], 64, 64, 4
    $region17: #{mlm_cls_forward.2} parent=1 // pred_fallthru
      _
    // Predicated region
    $region18: #{mlm_cls_forward.2} parent=1 // pred_check
      _
    $region19: #{mlm_cls_forward.2} parent=1 // pred_check_branch
      %114 = sbr.rel (0) target = $region21
    $region20: #{mlm_cls_forward.2} parent=1 // pred_region
      %115 = dma.done [#allocation3], 128
    $region21: #{mlm_cls_forward.2} parent=1 // pred_fallthru
      _
    %116 = vsyncpa [#allocation3], 1

// kernel: mlm_cls_forward.3
$region0: #{mlm_cls_forward.3}
  #allocation0 [shape = 'u32[]', space=smem, size = 0x4, offset = 0x4, fixed_abs, tag = 'smem constant byte address 0x4 - core index']
  #allocation1 [shape = 'u32[144,128]{1,0:T(1,128)}', space=vmem, size = 0x12000, scoped, tag = 'internal scratch']
  %s0 = inlined_call_operand.vmem [shape: bf16[2,32], index: 0, kind: input, shape index: {}]
  %s1 = inlined_call_operand.vmem [shape: bf16[2,32], index: 1, kind: input, shape index: {}]
  %s2 = inlined_call_operand.vmem [shape: bf16[32,256], index: 2, kind: input, shape index: {}]
  %s3 = inlined_call_operand.vmem [shape: bf16[32,128], index: 3, kind: input, shape index: {}]
  %s4 = inlined_call_operand.vmem [shape: f32[1,256], index: 4, kind: input, shape index: {}]
  %s5 = inlined_call_operand.hbm [shape: f32[2,128], index: 5, kind: output, shape index: {0}]
  %s6 = inlined_call_operand.hbm [shape: f32[2,128], index: 6, kind: output, shape index: {1}]
  %7 = xla_tuple %s5, %s6
  %s8 = sld [smem:[#allocation0]]
  $region38: #{mlm_cls_forward.3} parent=0
    _
  %s10 = ssub.s32 1, %s8
  %s11 = scalar_select 0, %s10, %s8
  $region1: #{mlm_cls_forward.3} parent=0
    #allocation2 [shape = 'u8[1024]{0}', space=vmem, size = 0x400, scoped, tag = 'output window, operand 0, single buffered']
    #allocation3 [shape = 's32[1]{0}', space=sflag, size = 0x4, scoped, tag = 'scoped memory for mlm_cls_forward.3']
    #allocation4 [shape = 'u8[1024]{0}', space=vmem, size = 0x400, scoped, tag = 'output window, operand 1, single buffered']
    #allocation5 [shape = 's32[1]{0}', space=sflag, size = 0x4, scoped, tag = 'scoped memory for mlm_cls_forward.3']
    %12 = vsyncpa [#allocation3], 0
    %13 = vsyncpa [#allocation5], 0
    // Predicated region
    $region2: #{mlm_cls_forward.3} parent=1 // pred_check
      _
    $region3: #{mlm_cls_forward.3} parent=1 // pred_check_branch
      %15 = sbr.rel (0) target = $region5
    $region4: #{mlm_cls_forward.3} parent=1 // pred_region
      _
    $region5: #{mlm_cls_forward.3} parent=1 // pred_fallthru
      _
    // Predicated region
    $region6: #{mlm_cls_forward.3} parent=1 // pred_check
      _
    $region7: #{mlm_cls_forward.3} parent=1 // pred_check_branch
      %17 = sbr.rel (0) target = $region9
    $region8: #{mlm_cls_forward.3} parent=1 // pred_region
      _
    $region9: #{mlm_cls_forward.3} parent=1 // pred_fallthru
      _
    // Predicated region
    $region10: #{mlm_cls_forward.3} parent=1 // pred_check
      _
    $region11: #{mlm_cls_forward.3} parent=1 // pred_check_branch
      %19 = sbr.rel (0) target = $region13
    $region12: #{mlm_cls_forward.3} parent=1 // pred_region
      _
    $region13: #{mlm_cls_forward.3} parent=1 // pred_fallthru
      _
    // Predicated region
    $region14: #{mlm_cls_forward.3} parent=1 // pred_check
      _
    $region15: #{mlm_cls_forward.3} parent=1 // pred_check_branch
      %21 = sbr.rel (0) target = $region17
    $region16: #{mlm_cls_forward.3} parent=1 // pred_region
      _
    $region17: #{mlm_cls_forward.3} parent=1 // pred_fallthru
      _
    // Predicated region
    $region18: #{mlm_cls_forward.3} parent=1 // pred_check
      _
    $region19: #{mlm_cls_forward.3} parent=1 // pred_check_branch
      %23 = sbr.rel (0) target = $region21
    $region20: #{mlm_cls_forward.3} parent=1 // pred_region
      _
    $region21: #{mlm_cls_forward.3} parent=1 // pred_fallthru
      _
    %v25 = vld [vmem:[%s0] sm:$0x1]
    %v26 = vld [vmem:[%s2] sm:$0xff]
    %v27 = vld [vmem:[%s2 + $0x8] sm:$0xff]
    %v28 = vld [vmem:[%s2 + $0x10] sm:$0xff]
    %v29 = vld [vmem:[%s2 + $0x18] sm:$0xff]
    %v30 = vld [vmem:[%s4] sm:$0x3]
    %v32 = vlaneseq
    %v33 = vshrl.u32 %v32, 7
    %v34 = vsub.s32 0, %v33
    %v35 = vrot.slane %v30, %v34
    %v36 = vlaneseq
    %v37 = vshrl.u32 %v36, 7
    %v38 = vsub.s32 1, %v37
    %v39 = vrot.slane %v30, %v38
    %v46 = vunpack.c.l.b16 %v26
    %v47 = vunpack.c.h.b16 %v26
    %v48 = vunpack.c.l.b16 %v27
    %v49 = vunpack.c.h.b16 %v27
    %v50 = vunpack.c.l.b16 %v28
    %v51 = vunpack.c.h.b16 %v28
    %v52 = vunpack.c.l.b16 %v29
    %v53 = vunpack.c.h.b16 %v29
    %v54 = vpack.c.b16 %v48, %v46
    %v55 = vpack.c.b16 %v49, %v47
    %v56 = vpack.c.b16 %v52, %v50
    %v57 = vpack.c.b16 %v53, %v51
    %vm62 = vcmask 261120
    %v64 = vsel %vm62, %v25, 0
    %66 = vmatprep.subr.bf16.mxu0 0
    %67 = vmatpush1.bf16.msra.mxu0 0
    %68 = vmatprep.subr.bf16.mxu0 0
    %69 = vmatpush1.bf16.msra.mxu0 0
    %70 = vmatprep.subr.bf16.mxu0 0
    %71 = vmatpush1.bf16.msra.mxu0 0
    %72 = vmatprep.subr.bf16.mxu0 0
    %73 = vmatpush1.bf16.msra.mxu0 0
    %74 = vmatprep.subr.bf16.mxu0 0
    %75 = vmatpush1.bf16.msra.mxu0 0
    %76 = vmatprep.subr.bf16.mxu0 0
    %77 = vmatpush1.bf16.msra.mxu0 0
    %78 = vmatprep.subr.bf16.mxu0 %v57
    %79 = vmatpush1.bf16.msra.mxu0 %v56
    %80 = vmatprep.subr.bf16.mxu0 %v55
    %81 = vmatpush1.bf16.msra.mxu0 %v54
    %82 = vmatprep.subr.bf16.mxu0 0
    %83 = vmatpush2.bf16.msra.mxu0 0
    %84 = vmatprep.subr.bf16.mxu0 0
    %85 = vmatpush2.bf16.msra.mxu0 0
    %86 = vmatprep.subr.bf16.mxu0 0
    %87 = vmatpush2.bf16.msra.mxu0 0
    %88 = vmatprep.subr.bf16.mxu0 0
    %89 = vmatpush2.bf16.msra.mxu0 0
    %90 = vmatprep.subr.bf16.mxu0 0
    %91 = vmatpush2.bf16.msra.mxu0 0
    %92 = vmatprep.subr.bf16.mxu0 0
    %93 = vmatpush2.bf16.msra.mxu0 0
    %94 = vmatprep.subr.bf16.mxu0 0
    %95 = vmatpush2.bf16.msra.mxu0 0
    %96 = vmatprep.subr.bf16.mxu0 0
    %97 = vmatpush2.bf16.msra.mxu0 0
    %98 = vmatprep.mubr.bf16.mxu0 0
    %99 = vmatmul.mubr.bf16.gmra.mxu0 %v64
    %v100 = vpop.f32.mrf.mxu0
    %v101 = vadd.f32 %v35, %v100
    %v102 = vpop.f32.mrf.mxu0
    %v103 = vadd.f32 %v39, %v102
    %v104 = vpop.f32.mrf.mxu0
    %v105 = vpop.f32.mrf.mxu0
    %106 = vdwg.mxu0
    %v107 = vld [vmem:[%s1] sm:$0x1]
    %v108 = vld [vmem:[%s3] sm:$0xf]
    %v109 = vld [vmem:[%s3 + $0x4] sm:$0xf]
    %v110 = vld [vmem:[%s3 + $0x8] sm:$0xf]
    %v111 = vld [vmem:[%s3 + $0xc] sm:$0xf]
    %v116 = vunpack.c.l.b16 %v108
    %v117 = vunpack.c.l.b16 %v109
    %v118 = vunpack.c.l.b16 %v110
    %v119 = vunpack.c.l.b16 %v111
    %v120 = vpack.c.b16 %v117, %v116
    %v121 = vpack.c.b16 %v119, %v118
    %v125 = vsel %vm62, %v107, 0
    %127 = vmatprep.subr.bf16.mxu0 0
    %128 = vmatpush1.bf16.msra.mxu0 0
    %129 = vmatprep.subr.bf16.mxu0 0
    %130 = vmatpush1.bf16.msra.mxu0 0
    %131 = vmatprep.subr.bf16.mxu0 0
    %132 = vmatpush1.bf16.msra.mxu0 0
    %133 = vmatprep.subr.bf16.mxu0 0
    %134 = vmatpush1.bf16.msra.mxu0 0
    %135 = vmatprep.subr.bf16.mxu0 0
    %136 = vmatpush1.bf16.msra.mxu0 0
    %137 = vmatprep.subr.bf16.mxu0 0
    %138 = vmatpush1.bf16.msra.mxu0 0
    %139 = vmatprep.subr.bf16.mxu0 0
    %140 = vmatpush1.bf16.msra.mxu0 %v121
    %141 = vmatprep.subr.bf16.mxu0 0
    %142 = vmatpush1.bf16.msra.mxu0 %v120
    %143 = vmatprep.subr.bf16.mxu0 0
    %144 = vmatpush2.bf16.msra.mxu0 0
    %145 = vmatprep.subr.bf16.mxu0 0
    %146 = vmatpush2.bf16.msra.mxu0 0
    %147 = vmatprep.subr.bf16.mxu0 0
    %148 = vmatpush2.bf16.msra.mxu0 0
    %149 = vmatprep.subr.bf16.mxu0 0
    %150 = vmatpush2.bf16.msra.mxu0 0
    %151 = vmatprep.subr.bf16.mxu0 0
    %152 = vmatpush2.bf16.msra.mxu0 0
    %153 = vmatprep.subr.bf16.mxu0 0
    %154 = vmatpush2.bf16.msra.mxu0 0
    %155 = vmatprep.subr.bf16.mxu0 0
    %156 = vmatpush2.bf16.msra.mxu0 0
    %157 = vmatprep.subr.bf16.mxu0 0
    %158 = vmatpush2.bf16.msra.mxu0 0
    %159 = vmatprep.mubr.bf16.mxu0 0
    %160 = vmatmul.mubr.bf16.gmra.mxu0 %v125
    %v161 = vpop.f32.mrf.mxu0
    %v162 = vadd.f32 0.0, %v161
    %v163 = vpop.f32.mrf.mxu0
    %v164 = vpop.f32.mrf.mxu0
    %v165 = vpop.f32.mrf.mxu0
    %166 = vdwg.mxu0
    %v167 = vxor.u32 %v101, 2147483648
    %v168 = vmul.f32 %v167, 1.442695
    %v169 = vpow.pop %v168
    %v170 = vadd.f32 %v169, 1.0
    %v171 = vrcp.pop %v170
    %v172 = vmul.f32 1.0, %v171
    %173 = vst [vmem:[#allocation2] sm:$0x3] %v172
    %v174 = vadd.f32 %v103, %v162
    %v175 = vmul.f32 %v174, %v174
    %vm176 = vcmask 1041408
    %v177 = vsel %vm176, %v175, 0.0
    %178 = vadd.xlane.f32.xlu0 %v177
    %v179 = vpop.xlane.xlu0 %178
    %v180 = vmax.f32 %v179, 1e-24
    %v181 = vrsqrt.pop %v180
    %v182 = vmul.f32 %v174, %v181
    %183 = vst [vmem:[#allocation4] sm:$0x3] %v182
    // Predicated region
    $region22: #{mlm_cls_forward.3} parent=1 // pred_check
      _
    $region23: #{mlm_cls_forward.3} parent=1 // pred_check_branch
      %185 = sbr.rel (0) target = $region25
    $region24: #{mlm_cls_forward.3} parent=1 // pred_region
      %s187 = ssub.s32 32, 32
      %188 = vsyncadd [#allocation3], %s187
      %s190 = sshll.u32 [#allocation2], 4
      %s191 = int_to_ptr.vmem [resolvable:$true] %s190
      %193 = dma.vmem_to_hbm [thread:$0]  %s191, 32, %s5, [#allocation3]
    $region25: #{mlm_cls_forward.3} parent=1 // pred_fallthru
      _
    // Predicated region
    $region26: #{mlm_cls_forward.3} parent=1 // pred_check
      _
    $region27: #{mlm_cls_forward.3} parent=1 // pred_check_branch
      %195 = sbr.rel (0) target = $region29
    $region28: #{mlm_cls_forward.3} parent=1 // pred_region
      %s197 = ssub.s32 32, 32
      %198 = vsyncadd [#allocation5], %s197
      %s200 = sshll.u32 [#allocation4], 4
      %s201 = int_to_ptr.vmem [resolvable:$true] %s200
      %203 = dma.vmem_to_hbm [thread:$0]  %s201, 32, %s6, [#allocation5]
    $region29: #{mlm_cls_forward.3} parent=1 // pred_fallthru
      _
    // Predicated region
    $region30: #{mlm_cls_forward.3} parent=1 // pred_check
      _
    $region31: #{mlm_cls_forward.3} parent=1 // pred_check_branch
      %205 = sbr.rel (0) target = $region33
    $region32: #{mlm_cls_forward.3} parent=1 // pred_region
      %206 = dma.done [#allocation3], 32
    $region33: #{mlm_cls_forward.3} parent=1 // pred_fallthru
      _
    // Predicated region
    $region34: #{mlm_cls_forward.3} parent=1 // pred_check
      _
    $region35: #{mlm_cls_forward.3} parent=1 // pred_check_branch
      %208 = sbr.rel (0) target = $region37
    $region36: #{mlm_cls_forward.3} parent=1 // pred_region
      %209 = dma.done [#allocation5], 32
    $region37: #{mlm_cls_forward.3} parent=1 // pred_fallthru
      _
    %210 = vsyncpa [#allocation3], 1
    %211 = vsyncpa [#allocation5], 1

</llo_original>
